<compile_context>
chip_gen: v5e
topology: v5e:2x2
jax: 0.10.0
libtpu: 0.0.40
codegen_flags: <defaults>
</compile_context>

<pallas_src>
import functools

import jax
import jax.numpy as jnp
from jax.experimental import pallas as pl
from jax.experimental.pallas import tpu as pltpu

_LANE = 128


def _res_alloc_kernel(w_ref, x_ref, o_ref):
    # w_ref: (3,)          f32 in SMEM (scalar prefetch)
    # x_ref: (tr, 128)     f32 in VMEM (batch over sublane x lane)
    # o_ref: (3, tr, 128)  f32 in VMEM (dense output slab)
    x = x_ref[...]  # (tr, 128), full dense vregs
    # Outer product with the 3 SMEM scalars, stacked into one slab so the
    # EUP tanh and the store each run once over dense (8,128)-aligned tiles.
    z = jnp.stack([w_ref[0] * x, w_ref[1] * x, w_ref[2] * x], axis=0)
    o_ref[...] = 0.5 * (jnp.tanh(0.5 * z) + 1.0)  # sigmoid, single EUP op


def _device_kind():
    try:
        return jax.devices()[0].device_kind.lower()
    except Exception:  # pragma: no cover - CPU/interpret fallback
        return ""


def _pick_block_rows():
    """Rows (sublanes) per grid step.

    Per-step in+out footprint = rows * 128 * 16 B (4 B in + 12 B out), x2 for
    double buffering.  Sized per generation's scoped-VMEM budget.
    """
    kind = _device_kind()
    if "v5" in kind:
        return 2048  # 4 MiB/step, 8 MiB double-buffered  (16 MiB scoped default)
    if "v6" in kind:
        return 4096  # 8 MiB/step, 16 MiB double-buffered (32 MiB scoped default)
    if "v7" in kind:
        return 4096  # 8 MiB/step, 16 MiB double-buffered (64 MiB *physical*)
    return 2048      # unknown chip: stay conservative


def _dimension_semantics():
    # v7x has 2 TensorCores per chip: shard the batch grid axis across them.
    if "v7" in _device_kind():
        return (pltpu.CORE_PARALLEL,)
    return ("parallel",)


@functools.partial(jax.jit, static_argnames=("block_rows", "out_layout"))
def res_alloc_forward(x, weight, *, block_rows=None, out_layout="b3"):
    """Forward pass of ResAllocModel.

    x: (B, 1) float32, weight: (3, 1) float32 (PyTorch nn.Linear layout).
    Returns sigmoid(x @ weight.T):
      out_layout="b3" (default): shape (B, 3), matching the PyTorch module.
      out_layout="3b": transpose-free (3, B) slab for fused consumers.
    """
    B = x.shape[0]
    xf = x.astype(jnp.float32).reshape(B)

    # Pad only to the next lane multiple (<= 127 extra elements) so the
    # contiguous (R, 128) reshape is free.  No padding to the block multiple.
    bp = _LANE * pl.cdiv(B, _LANE)
    if bp != B:
        xf = jnp.pad(xf, (0, bp - B))
    R = bp // _LANE
    x2d = xf.reshape(R, _LANE)

    tr = block_rows if block_rows is not None else _pick_block_rows()
    tr = min(tr, R)  # block == full extent for small B (single grid step)
    grid = (pl.cdiv(R, tr),)

    w_flat = weight.astype(jnp.float32).reshape(3)

    out3 = pl.pallas_call(
        _res_alloc_kernel,
        out_shape=jax.ShapeDtypeStruct((3, R, _LANE), jnp.float32),
        grid_spec=pltpu.PrefetchScalarGridSpec(
            num_scalar_prefetch=1,  # weight -> SMEM
            grid=grid,
            in_specs=[
                pl.BlockSpec((tr, _LANE), lambda i, w: (i, 0)),
            ],
            out_specs=pl.BlockSpec((3, tr, _LANE), lambda i, w: (0, i, 0)),
        ),
        compiler_params=pltpu.CompilerParams(
            dimension_semantics=_dimension_semantics(),
        ),
    )(w_flat, x2d)

    out_3b = out3.reshape(3, bp)[:, :B]
    if out_layout == "3b":
        return out_3b  # transpose-free layout for consumers that can fuse it
    return out_3b.T    # PyTorch (B, 3) layout


if __name__ == "__main__":
    key = jax.random.PRNGKey(0)
    k_x, k_w = jax.random.split(key)

    # Small shapes consistent with the module: x is (B, 1), weight is (3, 1).
    B = 8
    x = jax.random.normal(k_x, (B, 1), dtype=jnp.float32)
    weight = jax.random.normal(k_w, (3, 1), dtype=jnp.float32) * 0.5

    out = jax.block_until_ready(res_alloc_forward(x, weight))
    ref = jax.nn.sigmoid(x @ weight.T)
    assert out.shape == (B, 3)
    assert jnp.allclose(out, ref, atol=1e-5, rtol=1e-5)

    # Exercise the multi-step grid + ragged last row-block path
    # (B2=2085 -> R=17 rows of 128; block_rows=8 -> grid=3, ragged tail).
    B2 = 2085
    x2 = jax.random.normal(k_x, (B2, 1), dtype=jnp.float32)
    out2 = jax.block_until_ready(res_alloc_forward(x2, weight, block_rows=8))
    ref2 = jax.nn.sigmoid(x2 @ weight.T)
    assert out2.shape == (B2, 3)
    assert jnp.allclose(out2, ref2, atol=1e-5, rtol=1e-5)

    # Transpose-free output layout for fused consumers.
    out3b = jax.block_until_ready(res_alloc_forward(x2, weight, out_layout="3b"))
    assert out3b.shape == (3, B2)
    assert jnp.allclose(out3b.T, ref2, atol=1e-5, rtol=1e-5)

    print("KERNEL_OK")
</pallas_src>

<mosaic_0001>
module attributes {stable_mosaic.version = 11 : i64} {
  func.func @_res_alloc_kernel(%arg0: i32, %arg1: memref<3xf32, #tpu.memory_space<smem>>, %arg2: memref<1x128xf32, #tpu.memory_space<vmem>>, %arg3: memref<3x1x128xf32, #tpu.memory_space<vmem>>) attributes {dimension_semantics = [#tpu.dimension_semantics<parallel>], iteration_bounds = array<i64: 1>, scalar_prefetch = 1 : i64, scratch_operands = 0 : i64, tpu.core_type = #tpu.core_type<tc>, window_params = [{transform_indices = @transform_0, window_bounds = array<i64: 1, 128>}, {transform_indices = @transform_1, window_bounds = array<i64: 3, 1, 128>}]} {
    %c0 = arith.constant 0 : index
    %c0_0 = arith.constant 0 : index
    %0 = vector.load %arg2[%c0, %c0_0] : memref<1x128xf32, #tpu.memory_space<vmem>>, vector<1x128xf32>
    %c0_1 = arith.constant 0 : index
    %1 = memref.load %arg1[%c0_1] : memref<3xf32, #tpu.memory_space<smem>>
    %2 = vector.broadcast %1 : f32 to vector<1x128xf32>
    %3 = arith.mulf %2, %0 : vector<1x128xf32>
    %c1 = arith.constant 1 : index
    %4 = memref.load %arg1[%c1] : memref<3xf32, #tpu.memory_space<smem>>
    %5 = vector.broadcast %4 : f32 to vector<1x128xf32>
    %6 = arith.mulf %5, %0 : vector<1x128xf32>
    %c2 = arith.constant 2 : index
    %7 = memref.load %arg1[%c2] : memref<3xf32, #tpu.memory_space<smem>>
    %8 = vector.broadcast %7 : f32 to vector<1x128xf32>
    %9 = arith.mulf %8, %0 : vector<1x128xf32>
    %10 = vector.shape_cast %3 : vector<1x128xf32> to vector<1x1x128xf32>
    %11 = vector.shape_cast %6 : vector<1x128xf32> to vector<1x1x128xf32>
    %12 = vector.shape_cast %9 : vector<1x128xf32> to vector<1x1x128xf32>
    %13 = tpu.concatenate %10, %11, %12 in 0 : vector<1x1x128xf32>, vector<1x1x128xf32>, vector<1x1x128xf32> -> vector<3x1x128xf32>
    %cst = arith.constant 5.000000e-01 : f32
    %14 = vector.broadcast %cst : f32 to vector<3x1x128xf32>
    %15 = arith.mulf %14, %13 : vector<3x1x128xf32>
    %16 = math.tanh %15 : vector<3x1x128xf32>
    %cst_2 = arith.constant 1.000000e+00 : f32
    %17 = vector.broadcast %cst_2 : f32 to vector<3x1x128xf32>
    %18 = arith.addf %16, %17 : vector<3x1x128xf32>
    %cst_3 = arith.constant 5.000000e-01 : f32
    %19 = vector.broadcast %cst_3 : f32 to vector<3x1x128xf32>
    %20 = arith.mulf %19, %18 : vector<3x1x128xf32>
    %c0_4 = arith.constant 0 : index
    %c0_5 = arith.constant 0 : index
    %c0_6 = arith.constant 0 : index
    %21 = vector.load %arg3[%c0_4, %c0_5, %c0_6] : memref<3x1x128xf32, #tpu.memory_space<vmem>>, vector<3x1x128xf32>
    tpu.vector_store %arg3[%c0_4, %c0_5, %c0_6], %20 {strides = array<i32>} : memref<3x1x128xf32, #tpu.memory_space<vmem>>, vector<3x1x128xf32>,
    return
  }
  func.func @transform_0(%arg0: i32, %arg1: memref<3xf32, #tpu.memory_space<smem>>) -> (i32, i32) {
    %c0_i32 = arith.constant 0 : i32
    %c0_i32_0 = arith.constant 0 : i32
    return %arg0, %c0_i32 : i32, i32
  }
  func.func @transform_1(%arg0: i32, %arg1: memref<3xf32, #tpu.memory_space<smem>>) -> (i32, i32, i32) {
    %c0_i32 = arith.constant 0 : i32
    %c0_i32_0 = arith.constant 0 : i32
    %c0_i32_1 = arith.constant 0 : i32
    return %c0_i32, %arg0, %c0_i32_0 : i32, i32, i32
  }
}

</mosaic_0001>

<llo_original>
// kernel: res_alloc_forward.1
$region0: #{res_alloc_forward.1}
  #allocation0 [shape = 'u32[]', space=smem, size = 0x4, offset = 0x4, fixed_abs, tag = 'smem constant byte address 0x4 - core index']
  #allocation1 [shape = 'u32[72,128]{1,0:T(1,128)}', space=vmem, size = 0x9000, scoped, tag = 'internal scratch']
  #allocation2 [shape = 's32[1]{0}', space=sflag, size = 0x4, scoped, tag = 'scoped memory for res_alloc_forward.1']
  #allocation3 [shape = 'u8[512]{0}', space=smem, size = 0x200, scoped, tag = 'prefetched SMEM operand 0']
  %s0 = inlined_call_operand.vmem [shape: f32[3], index: 0, kind: input, shape index: {}]
  %s1 = inlined_call_operand.vmem [shape: f32[1,128], index: 1, kind: input, shape index: {}]
  %s2 = inlined_call_operand.vmem [shape: f32[3,1,128], index: 2, kind: output, shape index: {}]
  %s3 = sld [smem:[#allocation0]]
  $region14: #{res_alloc_forward.1} parent=0
    _
  %s5 = ssub.s32 1, %s3
  %s6 = scalar_select 0, %s5, %s3
  %s8 = sshll.u32 %s0, 4
  %s9 = int_to_ptr.vmem [resolvable:$true] %s8
  %11 = dma.vmem_to_smem %s9, 16, [#allocation3], [#allocation2]
  %13 = dma.done [#allocation2], 16
  %14 = sfence
  // Predicated region
  $region2: #{res_alloc_forward.1} parent=0 // pred_check
    _
  $region3: #{res_alloc_forward.1} parent=0 // pred_check_branch
    %16 = sbr.rel (0) target = $region5
  $region4: #{res_alloc_forward.1} parent=0 // pred_region
    _
  $region5: #{res_alloc_forward.1} parent=0 // pred_fallthru
    _
  %v17 = vld [vmem:[%s1] sm:$0x1]
  %s18 = sld [smem:[#allocation3]]
  %v19 = vstv %s18
  %v20 = vmul.f32 %v19, %v17
  %s21 = sld [smem:[#allocation3 + $0x1]]
  %v22 = vstv %s21
  %v23 = vmul.f32 %v22, %v17
  %s24 = sld [smem:[#allocation3 + $0x2]]
  %v25 = vstv %s24
  %v26 = vmul.f32 %v25, %v17
  %v27 = vmul.f32 %v20, 0.5
  %v28 = vmul.f32 %v23, 0.5
  %v29 = vmul.f32 %v26, 0.5
  %v30 = vtanh.pop %v27
  %v31 = vtanh.pop %v28
  %v32 = vtanh.pop %v29
  %v33 = vadd.f32 %v30, 1.0
  %v34 = vadd.f32 %v31, 1.0
  %v35 = vadd.f32 %v32, 1.0
  %v36 = vmul.f32 %v33, 0.5
  %v37 = vmul.f32 %v34, 0.5
  %v38 = vmul.f32 %v35, 0.5
  %39 = vst [vmem:[%s2] sm:$0x1] %v36
  %40 = vst [vmem:[%s2 + $0x1] sm:$0x1] %v37
  %41 = vst [vmem:[%s2 + $0x2] sm:$0x1] %v38
  // Predicated region
  $region6: #{res_alloc_forward.1} parent=0 // pred_check
    _
  $region7: #{res_alloc_forward.1} parent=0 // pred_check_branch
    %43 = sbr.rel (0) target = $region9
  $region8: #{res_alloc_forward.1} parent=0 // pred_region
    _
  $region9: #{res_alloc_forward.1} parent=0 // pred_fallthru
    _
  // Predicated region
  $region10: #{res_alloc_forward.1} parent=0 // pred_check
    _
  $region11: #{res_alloc_forward.1} parent=0 // pred_check_branch
    %45 = sbr.rel (0) target = $region13
  $region12: #{res_alloc_forward.1} parent=0 // pred_region
    _
  $region13: #{res_alloc_forward.1} parent=0 // pred_fallthru
    _

</llo_original>
